<compile_context>
chip_gen: v6e
topology: v6e:2x2x1
jax: 0.10.0
libtpu: 0.0.40
codegen_flags: <defaults>
</compile_context>

<pallas_src>
import jax
import jax.numpy as jnp
from jax.experimental import pallas as pl
from jax.experimental.pallas import tpu as pltpu


def _piecewise_pool_kernel(x_ref, m_ref, o_ref):
    """x_ref: (TB, H, L) native conv layout; m_ref: (TB, L, 3); o_ref: (TB, 3, H).

    The tile is relaid (H, L) -> (L, H) on the XLU (hidden under the input DMA in this
    memory-bound kernel); the reduction over L then runs on the sublane axis with H on
    lanes, and each piece's max is stored lane-dense with the -100 fused in.
    """
    # Cast to f32 first (exact for f32/bf16 inputs), then transpose the minor two dims.
    x = jnp.transpose(x_ref[...].astype(jnp.float32), (0, 2, 1))     # (TB, L, H)
    m = m_ref[...].astype(jnp.float32)                               # (TB, L, 3)
    for p in range(3):                                               # static unroll, 3 pieces
        v = x + m[:, :, p:p + 1]                                     # lane-broadcast add (VPU)
        # Reduce over L (sublanes), lane-dense store of (TB, 1, H), -100 fused in.
        o_ref[:, p:p + 1, :] = (
            jnp.max(v, axis=1, keepdims=True) - 100.0
        ).astype(o_ref.dtype)


def _round_up(n, m):
    return -(-n // m) * m


def _chip_tuning():
    """Per-generation VMEM budget / limit and TensorCore count (safe defaults otherwise)."""
    kind = ""
    try:
        kind = jax.devices()[0].device_kind.lower()
    except Exception:
        pass
    if ("v7" in kind) or ("7x" in kind):
        # 2 TCs/chip, 64 MiB VMEM per TC: stay conservative, balance work across cores.
        return dict(num_tc=2, vmem_budget=20 << 20, vmem_limit=48 << 20)
    if ("v6" in kind) or ("v5e" in kind) or ("v5 lite" in kind) or ("v5litepod" in kind):
        # Single TC, 128 MiB physical VMEM: bigger tiles, fewer grid steps.
        return dict(num_tc=1, vmem_budget=56 << 20, vmem_limit=96 << 20)
    # Unknown (v4 / v5p / interpret): conservative scoped-VMEM defaults.
    return dict(num_tc=1, vmem_budget=24 << 20, vmem_limit=32 << 20)


def _pick_tb(B, H, L, itemsize, *, vmem_budget, num_tc):
    """Largest batch-block whose *padded* double-buffered tiles fit the VMEM budget."""
    x_tile = _round_up(H, 8) * _round_up(L, 128) * itemsize      # (H, L) native input tile
    m_tile = _round_up(L, 8) * 128 * itemsize                    # (L, 3): lanes padded 3 -> 128
    o_tile = 8 * _round_up(H, 128) * itemsize                    # (3, H): sublanes padded 3 -> 8
    xt_tile = _round_up(L, 8) * _round_up(H, 128) * 4            # f32 transposed scratch (single)
    per_b = 2 * (x_tile + m_tile) + 2 * o_tile + xt_tile         # double-buffered in/out + scratch
    tb = max(1, min(B, int(vmem_budget) // max(per_b, 1)))
    if num_tc > 1 and B > 1:
        # Dual-TC chips: keep >= 2 blocks per core (when B allows) so both TensorCores
        # get comparable, non-ragged work. Single-TC chips take the biggest tile.
        target_steps = min(B, 2 * num_tc)
        tb = min(tb, pl.cdiv(B, target_steps))
    return int(tb)


def piecewise_pooling(x, mask, hidden_size, *, tb=None):
    """Pallas port of `_PiecewisePooling.forward`.

    x:    (B, H, L, 1) or (B, H, L) float  -- conv feature map (native conv layout)
    mask: (B, L, 3) float                  -- PCNN piece mask (values 0 / 100)
    returns (B, 3 * hidden_size), matching torch's `.view(-1, hidden_size*3)`.
    """
    if x.ndim == 4:
        x = x[..., 0]                                  # squeeze trailing 1 (free, no relayout)
    B, H, L = x.shape
    assert H == hidden_size
    assert mask.shape == (B, L, 3)

    # Mask is tiny (B*L*3); in-kernel math is f32 regardless of x's dtype.
    mask = mask.astype(jnp.float32)

    tune = _chip_tuning()
    if tb is None:
        tb = _pick_tb(B, H, L, x.dtype.itemsize,
                      vmem_budget=tune["vmem_budget"], num_tc=tune["num_tc"])
    grid = (pl.cdiv(B, tb),)

    out_b3h = pl.pallas_call(
        _piecewise_pool_kernel,
        out_shape=jax.ShapeDtypeStruct((B, 3, H), x.dtype),
        grid_spec=pl.GridSpec(
            grid=grid,
            in_specs=[
                # x fed in native (B, H, L) layout -- no wrapper transpose, one HBM pass.
                pl.BlockSpec((tb, H, L), lambda b: (b, 0, 0)),
                pl.BlockSpec((tb, L, 3), lambda b: (b, 0, 0)),
            ],
            out_specs=pl.BlockSpec((tb, 3, H), lambda b: (b, 0, 0)),
        ),
        compiler_params=pltpu.CompilerParams(
            dimension_semantics=("parallel",),         # shard batch blocks across TCs
            vmem_limit_bytes=tune["vmem_limit"],
        ),
    )(x, mask)

    # Output is tiny (3*H per batch vs L*H input): the (B,3,H)->(B,H,3) relayout and the
    # reshape to (B, 3H) (torch .view on contiguous (B, H, 3)) stay in plain JAX.
    return jnp.transpose(out_b3h, (0, 2, 1)).reshape(B, 3 * hidden_size)


def piecewise_pooling_ref(x, mask, hidden_size):
    """Pure-JAX reference mirroring the PyTorch forward exactly (f32 math)."""
    if x.ndim == 3:
        x = x[..., None]                               # (B, H, L, 1)
    x = x.astype(jnp.float32)
    m4 = mask.astype(jnp.float32)[:, None, :, :]       # (B, 1, L, 3)
    pooled = jnp.max(m4 + x, axis=2) - 100.0           # (B, H, 3)
    return pooled.reshape(-1, hidden_size * 3)


if __name__ == "__main__":
    def run_case(key, B, H, L, dtype=jnp.float32, tb=None, atol=1e-5, rtol=1e-5):
        kx, kp = jax.random.split(key)
        # Conv feature map (synthetic), PyTorch layout (B, H, L, 1).
        x = jax.random.normal(kx, (B, H, L, 1), dtype=jnp.float32).astype(dtype)
        # Piecewise mask: 100 for the position's piece, 0 otherwise (standard PCNN trick).
        piece_id = jax.random.randint(kp, (B, L), 0, 3)
        mask = jax.nn.one_hot(piece_id, 3, dtype=jnp.float32) * 100.0   # (B, L, 3)

        out = jax.block_until_ready(piecewise_pooling(x, mask, H, tb=tb))
        ref = piecewise_pooling_ref(x, mask, H)
        assert out.shape == (B, 3 * H), out.shape
        assert jnp.allclose(out.astype(jnp.float32), ref, atol=atol, rtol=rtol), \
            f"mismatch at B={B}, H={H}, L={L}, dtype={dtype}"

    key = jax.random.PRNGKey(0)
    k1, k2, k3, k4 = jax.random.split(key, 4)
    run_case(k1, B=2, H=32, L=16)                       # auto tb
    run_case(k2, B=5, H=64, L=24)                       # auto tb (chip-dependent)
    run_case(k3, B=5, H=64, L=24, tb=2)                 # forced ragged grid (blocks 2,2,1)
    run_case(k4, B=3, H=48, L=20, dtype=jnp.bfloat16,   # bf16 HBM traffic, f32 in-kernel math
             atol=0.5, rtol=0.0)

    print("KERNEL_OK")
</pallas_src>

<mosaic_0001>
module attributes {stable_mosaic.version = 11 : i64} {
  func.func @_piecewise_pool_kernel(%arg0: i32, %arg1: memref<2x32x16xf32, #tpu.memory_space<vmem>>, %arg2: memref<2x16x3xf32, #tpu.memory_space<vmem>>, %arg3: memref<2x3x32xf32, #tpu.memory_space<vmem>>) attributes {dimension_semantics = [#tpu.dimension_semantics<parallel>], iteration_bounds = array<i64: 1>, scalar_prefetch = 0 : i64, scratch_operands = 0 : i64, tpu.core_type = #tpu.core_type<tc>, window_params = [{transform_indices = @transform_0, window_bounds = array<i64: 2, 32, 16>}, {transform_indices = @transform_1, window_bounds = array<i64: 2, 16, 3>}, {transform_indices = @transform_2, window_bounds = array<i64: 2, 3, 32>}]} {
    %c0 = arith.constant 0 : index
    %c0_0 = arith.constant 0 : index
    %c0_1 = arith.constant 0 : index
    %0 = vector.load %arg1[%c0, %c0_0, %c0_1] : memref<2x32x16xf32, #tpu.memory_space<vmem>>, vector<2x32x16xf32>
    %1 = tpu.transpose %0, [0, 2, 1] : vector<2x32x16xf32> -> vector<2x16x32xf32>
    %c0_2 = arith.constant 0 : index
    %c0_3 = arith.constant 0 : index
    %c0_4 = arith.constant 0 : index
    %2 = vector.load %arg2[%c0_2, %c0_3, %c0_4] : memref<2x16x3xf32, #tpu.memory_space<vmem>>, vector<2x16x3xf32>
    %3 = vector.extract_strided_slice %2 {offsets = [0, 0, 0], sizes = [2, 16, 1], strides = [1, 1, 1]} : vector<2x16x3xf32> to vector<2x16x1xf32>
    %4 = vector.broadcast %3 : vector<2x16x1xf32> to vector<2x16x32xf32>
    %5 = arith.addf %1, %4 : vector<2x16x32xf32>
    %cst = arith.constant dense<0xFF800000> : vector<2x32xf32>
    %6 = vector.multi_reduction <maximumf>, %5, %cst [1] : vector<2x16x32xf32> to vector<2x32xf32>
    %7 = vector.shape_cast %6 : vector<2x32xf32> to vector<2x1x32xf32>
    %cst_5 = arith.constant 1.000000e+02 : f32
    %8 = vector.broadcast %cst_5 : f32 to vector<2x1x32xf32>
    %9 = arith.subf %7, %8 : vector<2x1x32xf32>
    %c0_6 = arith.constant 0 : index
    %c0_7 = arith.constant 0 : index
    %c0_8 = arith.constant 0 : index
    %10 = vector.load %arg3[%c0_6, %c0_7, %c0_8] : memref<2x3x32xf32, #tpu.memory_space<vmem>>, vector<2x1x32xf32>
    tpu.vector_store %arg3[%c0_6, %c0_7, %c0_8], %9 {strides = array<i32>} : memref<2x3x32xf32, #tpu.memory_space<vmem>>, vector<2x1x32xf32>,
    %11 = vector.extract_strided_slice %2 {offsets = [0, 0, 1], sizes = [2, 16, 1], strides = [1, 1, 1]} : vector<2x16x3xf32> to vector<2x16x1xf32>
    %12 = vector.broadcast %11 : vector<2x16x1xf32> to vector<2x16x32xf32>
    %13 = arith.addf %1, %12 : vector<2x16x32xf32>
    %cst_9 = arith.constant dense<0xFF800000> : vector<2x32xf32>
    %14 = vector.multi_reduction <maximumf>, %13, %cst_9 [1] : vector<2x16x32xf32> to vector<2x32xf32>
    %15 = vector.shape_cast %14 : vector<2x32xf32> to vector<2x1x32xf32>
    %cst_10 = arith.constant 1.000000e+02 : f32
    %16 = vector.broadcast %cst_10 : f32 to vector<2x1x32xf32>
    %17 = arith.subf %15, %16 : vector<2x1x32xf32>
    %c0_11 = arith.constant 0 : index
    %c1 = arith.constant 1 : index
    %c0_12 = arith.constant 0 : index
    %18 = vector.load %arg3[%c0_11, %c1, %c0_12] : memref<2x3x32xf32, #tpu.memory_space<vmem>>, vector<2x1x32xf32>
    tpu.vector_store %arg3[%c0_11, %c1, %c0_12], %17 {strides = array<i32>} : memref<2x3x32xf32, #tpu.memory_space<vmem>>, vector<2x1x32xf32>,
    %19 = vector.extract_strided_slice %2 {offsets = [0, 0, 2], sizes = [2, 16, 1], strides = [1, 1, 1]} : vector<2x16x3xf32> to vector<2x16x1xf32>
    %20 = vector.broadcast %19 : vector<2x16x1xf32> to vector<2x16x32xf32>
    %21 = arith.addf %1, %20 : vector<2x16x32xf32>
    %cst_13 = arith.constant dense<0xFF800000> : vector<2x32xf32>
    %22 = vector.multi_reduction <maximumf>, %21, %cst_13 [1] : vector<2x16x32xf32> to vector<2x32xf32>
    %23 = vector.shape_cast %22 : vector<2x32xf32> to vector<2x1x32xf32>
    %cst_14 = arith.constant 1.000000e+02 : f32
    %24 = vector.broadcast %cst_14 : f32 to vector<2x1x32xf32>
    %25 = arith.subf %23, %24 : vector<2x1x32xf32>
    %c0_15 = arith.constant 0 : index
    %c2 = arith.constant 2 : index
    %c0_16 = arith.constant 0 : index
    %26 = vector.load %arg3[%c0_15, %c2, %c0_16] : memref<2x3x32xf32, #tpu.memory_space<vmem>>, vector<2x1x32xf32>
    tpu.vector_store %arg3[%c0_15, %c2, %c0_16], %25 {strides = array<i32>} : memref<2x3x32xf32, #tpu.memory_space<vmem>>, vector<2x1x32xf32>,
    return
  }
  func.func @transform_0(%arg0: i32) -> (i32, i32, i32) {
    %c0_i32 = arith.constant 0 : i32
    %c0_i32_0 = arith.constant 0 : i32
    %c0_i32_1 = arith.constant 0 : i32
    return %arg0, %c0_i32, %c0_i32_0 : i32, i32, i32
  }
  func.func @transform_1(%arg0: i32) -> (i32, i32, i32) {
    %c0_i32 = arith.constant 0 : i32
    %c0_i32_0 = arith.constant 0 : i32
    %c0_i32_1 = arith.constant 0 : i32
    return %arg0, %c0_i32, %c0_i32_0 : i32, i32, i32
  }
  func.func @transform_2(%arg0: i32) -> (i32, i32, i32) {
    %c0_i32 = arith.constant 0 : i32
    %c0_i32_0 = arith.constant 0 : i32
    %c0_i32_1 = arith.constant 0 : i32
    return %arg0, %c0_i32, %c0_i32_0 : i32, i32, i32
  }
}

</mosaic_0001>

<llo_original>
// kernel: tpu_custom_call.1
$region0: #{tpu_custom_call.1}
  #allocation0 [shape = 'u32[]', space=smem, size = 0x4, offset = 0x4, fixed_abs, tag = 'smem constant byte address 0x4 - core index']
  #allocation1 [shape = 'u32[144,128]{1,0:T(1,128)}', space=vmem, size = 0x12000, scoped, tag = 'internal scratch']
  %s0 = inlined_call_operand.vmem [shape: f32[2,32,16], index: 0, kind: input, shape index: {}]
  %s1 = inlined_call_operand.vmem [shape: f32[2,16,3], index: 1, kind: input, shape index: {}]
  %s2 = inlined_call_operand.vmem [shape: f32[2,3,32], index: 2, kind: output, shape index: {}]
  %s3 = sld [smem:[#allocation0]]
  $region18: #{tpu_custom_call.1} parent=0
    _
  %s5 = ssub.s32 1, %s3
  %s6 = scalar_select 0, %s5, %s3
  // Predicated region
  $region2: #{tpu_custom_call.1} parent=0 // pred_check
    _
  $region3: #{tpu_custom_call.1} parent=0 // pred_check_branch
    %8 = sbr.rel (0) target = $region5
  $region4: #{tpu_custom_call.1} parent=0 // pred_region
    _
  $region5: #{tpu_custom_call.1} parent=0 // pred_fallthru
    _
  // Predicated region
  $region6: #{tpu_custom_call.1} parent=0 // pred_check
    _
  $region7: #{tpu_custom_call.1} parent=0 // pred_check_branch
    %10 = sbr.rel (0) target = $region9
  $region8: #{tpu_custom_call.1} parent=0 // pred_region
    _
  $region9: #{tpu_custom_call.1} parent=0 // pred_fallthru
    _
  %v11 = vld [vmem:[%s0] sm:$0xff]
  %v12 = vld [vmem:[%s0 + $0x8] sm:$0xff]
  %v13 = vld [vmem:[%s0 + $0x10] sm:$0xff]
  %v14 = vld [vmem:[%s0 + $0x18] sm:$0xff]
  %v15 = vld [vmem:[%s0 + $0x20] sm:$0xff]
  %v16 = vld [vmem:[%s0 + $0x28] sm:$0xff]
  %v17 = vld [vmem:[%s0 + $0x30] sm:$0xff]
  %v18 = vld [vmem:[%s0 + $0x38] sm:$0xff]
  %19 = vxpose.xlu0.b32.start [1/16] %v11, 128
  %20 = vxpose.xlu0.b32.cont [2/16] %v12, 128
  %21 = vxpose.xlu0.b32.cont [3/16] %v13, 128
  %22 = vxpose.xlu0.b32.cont [4/16] %v14, 128
  %23 = vxpose.xlu0.b32.cont [5/16] 0.0, 128
  %24 = vxpose.xlu0.b32.cont [6/16] 0.0, 128
  %25 = vxpose.xlu0.b32.cont [7/16] 0.0, 128
  %26 = vxpose.xlu0.b32.cont [8/16] 0.0, 128
  %27 = vxpose.xlu0.b32.cont [9/16] 0.0, 128
  %28 = vxpose.xlu0.b32.cont [10/16] 0.0, 128
  %29 = vxpose.xlu0.b32.cont [11/16] 0.0, 128
  %30 = vxpose.xlu0.b32.cont [12/16] 0.0, 128
  %31 = vxpose.xlu0.b32.cont [13/16] 0.0, 128
  %32 = vxpose.xlu0.b32.cont [14/16] 0.0, 128
  %33 = vxpose.xlu0.b32.cont [15/16] 0.0, 128
  %34 = vxpose.xlu0.b32.end [16/16] 0.0, 128
  %v35 = vpop.trf.xlu0
  %v36 = vpop.trf.xlu0
  %v37 = vpop.trf.xlu0
  %v38 = vpop.trf.xlu0
  %v39 = vpop.trf.xlu0
  %v40 = vpop.trf.xlu0
  %v41 = vpop.trf.xlu0
  %v42 = vpop.trf.xlu0
  %v43 = vpop.trf.xlu0
  %v44 = vpop.trf.xlu0
  %v45 = vpop.trf.xlu0
  %v46 = vpop.trf.xlu0
  %v47 = vpop.trf.xlu0
  %v48 = vpop.trf.xlu0
  %v49 = vpop.trf.xlu0
  %v50 = vpop.trf.xlu0
  %51 = vxpose.xlu0.b32.start [1/16] %v15, 128
  %52 = vxpose.xlu0.b32.cont [2/16] %v16, 128
  %53 = vxpose.xlu0.b32.cont [3/16] %v17, 128
  %54 = vxpose.xlu0.b32.cont [4/16] %v18, 128
  %55 = vxpose.xlu0.b32.cont [5/16] 0.0, 128
  %56 = vxpose.xlu0.b32.cont [6/16] 0.0, 128
  %57 = vxpose.xlu0.b32.cont [7/16] 0.0, 128
  %58 = vxpose.xlu0.b32.cont [8/16] 0.0, 128
  %59 = vxpose.xlu0.b32.cont [9/16] 0.0, 128
  %60 = vxpose.xlu0.b32.cont [10/16] 0.0, 128
  %61 = vxpose.xlu0.b32.cont [11/16] 0.0, 128
  %62 = vxpose.xlu0.b32.cont [12/16] 0.0, 128
  %63 = vxpose.xlu0.b32.cont [13/16] 0.0, 128
  %64 = vxpose.xlu0.b32.cont [14/16] 0.0, 128
  %65 = vxpose.xlu0.b32.cont [15/16] 0.0, 128
  %66 = vxpose.xlu0.b32.end [16/16] 0.0, 128
  %v67 = vpop.trf.xlu0
  %v68 = vpop.trf.xlu0
  %v69 = vpop.trf.xlu0
  %v70 = vpop.trf.xlu0
  %v71 = vpop.trf.xlu0
  %v72 = vpop.trf.xlu0
  %v73 = vpop.trf.xlu0
  %v74 = vpop.trf.xlu0
  %v75 = vpop.trf.xlu0
  %v76 = vpop.trf.xlu0
  %v77 = vpop.trf.xlu0
  %v78 = vpop.trf.xlu0
  %v79 = vpop.trf.xlu0
  %v80 = vpop.trf.xlu0
  %v81 = vpop.trf.xlu0
  %v82 = vpop.trf.xlu0
  %v83 = vld [vmem:[%s1] sm:$0xff]
  %v84 = vld [vmem:[%s1 + $0x8] sm:$0xff]
  %v85 = vld [vmem:[%s1 + $0x10] sm:$0xff]
  %v86 = vld [vmem:[%s1 + $0x18] sm:$0xff]
  %88 = vset.pattern.permute.xlu0 0
  %89 = vperm.xlu0 %88, %v83
  %v90 = vpop.permute.xlu0 %89
  %93 = vset.pattern.permute.xlu0 0
  %94 = vperm.xlu0 %93, %v84
  %v95 = vpop.permute.xlu0 %94
  %98 = vset.pattern.permute.xlu0 0
  %99 = vperm.xlu0 %98, %v85
  %v100 = vpop.permute.xlu0 %99
  %103 = vset.pattern.permute.xlu0 0
  %104 = vperm.xlu0 %103, %v86
  %v105 = vpop.permute.xlu0 %104
  %v107 = vadd.f32 %v35, %v90
  %v108 = vadd.f32 %v36, %v95
  %v109 = vadd.f32 %v67, %v100
  %v110 = vadd.f32 %v68, %v105
  %vm111 = vcmask 261120
  %v112 = vsel %vm111, %v107, -inf
  %v113 = vsel %vm111, %v108, -inf
  %v114 = vmax.f32 %v112, %v113
  %v115 = vrot.slane %v114, 4
  %v116 = vmax.f32 %v114, %v115
  %v117 = vrot.slane %v116, 2
  %v118 = vmax.f32 %v116, %v117
  %v119 = vrot.slane %v118, 1
  %v120 = vmax.f32 %v118, %v119
  %v121 = vsel %vm111, %v109, -inf
  %v122 = vsel %vm111, %v110, -inf
  %v123 = vmax.f32 %v121, %v122
  %v124 = vrot.slane %v123, 4
  %v125 = vmax.f32 %v123, %v124
  %v126 = vrot.slane %v125, 2
  %v127 = vmax.f32 %v125, %v126
  %v128 = vrot.slane %v127, 1
  %v129 = vmax.f32 %v127, %v128
  %v130 = vsub.f32 %v120, 100.0
  %v131 = vsub.f32 %v129, 100.0
  %vm132 = vcmask 253952
  %133 = vst.msk [vmem:[%s2] sm:$0x1] %vm132, %v130
  %134 = vst.msk [vmem:[%s2 + $0x4] sm:$0x1] %vm132, %v131
  %135 = vset.pattern.permute.xlu0 1
  %136 = vperm.xlu0 %135, %v83
  %v137 = vpop.permute.xlu0 %136
  %139 = vset.pattern.permute.xlu0 1
  %140 = vperm.xlu0 %139, %v84
  %v141 = vpop.permute.xlu0 %140
  %143 = vset.pattern.permute.xlu0 1
  %144 = vperm.xlu0 %143, %v85
  %v145 = vpop.permute.xlu0 %144
  %147 = vset.pattern.permute.xlu0 1
  %148 = vperm.xlu0 %147, %v86
  %v149 = vpop.permute.xlu0 %148
  %v151 = vadd.f32 %v35, %v137
  %v152 = vadd.f32 %v36, %v141
  %v153 = vadd.f32 %v67, %v145
  %v154 = vadd.f32 %v68, %v149
  %v155 = vsel %vm111, %v151, -inf
  %v156 = vsel %vm111, %v152, -inf
  %v157 = vmax.f32 %v155, %v156
  %v158 = vrot.slane %v157, 4
  %v159 = vmax.f32 %v157, %v158
  %v160 = vrot.slane %v159, 2
  %v161 = vmax.f32 %v159, %v160
  %v162 = vrot.slane %v161, 1
  %v163 = vmax.f32 %v161, %v162
  %v164 = vsel %vm111, %v153, -inf
  %v165 = vsel %vm111, %v154, -inf
  %v166 = vmax.f32 %v164, %v165
  %v167 = vrot.slane %v166, 4
  %v168 = vmax.f32 %v166, %v167
  %v169 = vrot.slane %v168, 2
  %v170 = vmax.f32 %v168, %v169
  %v171 = vrot.slane %v170, 1
  %v172 = vmax.f32 %v170, %v171
  %v173 = vsub.f32 %v163, 100.0
  %v174 = vsub.f32 %v172, 100.0
  %175 = vst.msk [vmem:[%s2 + $0x1] sm:$0x1] %vm132, %v173
  %176 = vst.msk [vmem:[%s2 + $0x5] sm:$0x1] %vm132, %v174
  %177 = vset.pattern.permute.xlu0 2
  %178 = vperm.xlu0 %177, %v83
  %v179 = vpop.permute.xlu0 %178
  %181 = vset.pattern.permute.xlu0 2
  %182 = vperm.xlu0 %181, %v84
  %v183 = vpop.permute.xlu0 %182
  %185 = vset.pattern.permute.xlu0 2
  %186 = vperm.xlu0 %185, %v85
  %v187 = vpop.permute.xlu0 %186
  %189 = vset.pattern.permute.xlu0 2
  %190 = vperm.xlu0 %189, %v86
  %v191 = vpop.permute.xlu0 %190
  %v193 = vadd.f32 %v35, %v179
  %v194 = vadd.f32 %v36, %v183
  %v195 = vadd.f32 %v67, %v187
  %v196 = vadd.f32 %v68, %v191
  %v197 = vsel %vm111, %v193, -inf
  %v198 = vsel %vm111, %v194, -inf
  %v199 = vmax.f32 %v197, %v198
  %v200 = vrot.slane %v199, 4
  %v201 = vmax.f32 %v199, %v200
  %v202 = vrot.slane %v201, 2
  %v203 = vmax.f32 %v201, %v202
  %v204 = vrot.slane %v203, 1
  %v205 = vmax.f32 %v203, %v204
  %v206 = vsel %vm111, %v195, -inf
  %v207 = vsel %vm111, %v196, -inf
  %v208 = vmax.f32 %v206, %v207
  %v209 = vrot.slane %v208, 4
  %v210 = vmax.f32 %v208, %v209
  %v211 = vrot.slane %v210, 2
  %v212 = vmax.f32 %v210, %v211
  %v213 = vrot.slane %v212, 1
  %v214 = vmax.f32 %v212, %v213
  %v215 = vsub.f32 %v205, 100.0
  %v216 = vsub.f32 %v214, 100.0
  %217 = vst.msk [vmem:[%s2 + $0x2] sm:$0x1] %vm132, %v215
  %218 = vst.msk [vmem:[%s2 + $0x6] sm:$0x1] %vm132, %v216
  // Predicated region
  $region10: #{tpu_custom_call.1} parent=0 // pred_check
    _
  $region11: #{tpu_custom_call.1} parent=0 // pred_check_branch
    %220 = sbr.rel (0) target = $region13
  $region12: #{tpu_custom_call.1} parent=0 // pred_region
    _
  $region13: #{tpu_custom_call.1} parent=0 // pred_fallthru
    _
  // Predicated region
  $region14: #{tpu_custom_call.1} parent=0 // pred_check
    _
  $region15: #{tpu_custom_call.1} parent=0 // pred_check_branch
    %222 = sbr.rel (0) target = $region17
  $region16: #{tpu_custom_call.1} parent=0 // pred_region
    _
  $region17: #{tpu_custom_call.1} parent=0 // pred_fallthru
    _

</llo_original>
